<compile_context>
chip_gen: v5e
topology: v5e:2x2
jax: 0.10.0
libtpu: 0.0.40
codegen_flags: <defaults>
</compile_context>

<pallas_src>
import functools

import jax
import jax.numpy as jnp
from jax.experimental import pallas as pl
from jax.experimental.pallas import tpu as pltpu


# ----------------------------------------------------------------------------
# Fused kernel: pool-combine + multiply + (conv1x1 o conv1x1 o BN) matmul + ReLU
# ----------------------------------------------------------------------------
def attention_core_kernel(taps_ref, att_ref, wf_ref, bf_ref, out_ref):
    # taps_ref: [4, TM, 64] bf16 per-output-row pooling partials:
    #   0: W-window max, H-pair p=oh     1: W-window max, H-pair p=oh+1
    #   2: W-window sum, H-pair p=oh     3: W-window sum, H-pair p=oh+1
    # MaxPool2d(4, stride=2, pad=2): -inf padding already applied in wrapper.
    mx = jnp.maximum(taps_ref[0].astype(jnp.float32),
                     taps_ref[1].astype(jnp.float32))
    # AvgPool2d(4, stride=2, pad=2), count_include_pad=True: zero pads, /16.
    av = (taps_ref[2].astype(jnp.float32) +
          taps_ref[3].astype(jnp.float32)) * (1.0 / 16.0)
    # current_attention * last_attention
    cur = (mx + av) * att_ref[...].astype(jnp.float32)            # [TM, 64] f32
    # conv1x1 -> conv1x1 -> BatchNorm(eval) folded into one affine MXU matmul.
    y = jnp.dot(cur.astype(jnp.bfloat16), wf_ref[...],
                preferred_element_type=jnp.float32) + bf_ref[...]  # [TM, 128]
    out_ref[...] = jnp.maximum(y, 0.0)


# ----------------------------------------------------------------------------
# Wrapper-side layout plumbing (separable-pool partials, pure JAX)
# ----------------------------------------------------------------------------
def _pool_partial_taps(obs_nchw, k=4, stride=2, pad=2):
    """NCHW obs -> [4, M, C] bf16 per-output-row pooling partials, M=B*OH*OW."""
    B, C, H, W = obs_nchw.shape
    oh = (H + 2 * pad - k) // stride + 1
    ow = (W + 2 * pad - k) // stride + 1
    x = jnp.transpose(obs_nchw, (0, 2, 3, 1)).astype(jnp.float32)   # [B,H,W,C]
    xm = jnp.pad(x, ((0, 0), (pad, pad), (pad, pad), (0, 0)),
                 constant_values=float("-inf"))                     # -inf pad (max)
    xs = jnp.pad(x, ((0, 0), (pad, pad), (pad, pad), (0, 0)))       # zero pad (avg)

    # W-direction 4-tap stride-2 partial reduce -> [B, H+2*pad, OW, C]
    wmax = wsum = None
    for dj in range(k):
        sm = xm[:, :, dj: dj + stride * ow: stride, :]
        ss = xs[:, :, dj: dj + stride * ow: stride, :]
        assert sm.shape[2] == ow and ss.shape[2] == ow
        wmax = sm if wmax is None else jnp.maximum(wmax, sm)
        wsum = ss if wsum is None else wsum + ss

    # H-direction: pre-reduce each stride-2 padded-row pair; output row oh
    # then needs exactly pairs {oh, oh+1} (window [2*oh, 2*oh+4)).
    npair = oh + 1
    pmax = jnp.maximum(wmax[:, 0:2 * npair:2], wmax[:, 1:2 * npair:2])
    psum = wsum[:, 0:2 * npair:2] + wsum[:, 1:2 * npair:2]
    assert pmax.shape[1] == npair and psum.shape[1] == npair

    def rows(a):                                                    # -> [M, C]
        return a.reshape(B * oh * ow, C)

    taps = jnp.stack([rows(pmax[:, 0:oh]), rows(pmax[:, 1:oh + 1]),
                      rows(psum[:, 0:oh]), rows(psum[:, 1:oh + 1])], axis=0)
    return taps.astype(jnp.bfloat16), oh, ow


def _pick_tm(m):
    # Largest tile with >= 2 grid steps (keeps both v7x TCs busy); at tm=1024 the
    # double-buffered working set is ~2.3 MiB -> safe on 64 MiB v7x VMEM too.
    for tm in (1024, 512, 256, 128):
        if m >= 2 * tm:
            return tm
    return 128


def attention_core_forward(observation, last_attention, params, *, tm=None):
    """observation: [B,64,H,W]; last_attention: [B,64,OH,OW] -> [B,128,OH,OW]."""
    B, C, H, W = observation.shape
    taps, oh, ow = _pool_partial_taps(observation)
    M = B * oh * ow
    c_out = params["b2"].shape[0]                                   # 128

    att_rows = jnp.transpose(last_attention, (0, 2, 3, 1)).reshape(M, C)
    att_rows = att_rows.astype(jnp.bfloat16)

    if tm is None:
        tm = _pick_tm(M)
    n_steps = pl.cdiv(M, tm)
    m_pad = n_steps * tm
    if m_pad != M:
        # Padded rows see all-zero taps/attention -> benign finite values.
        taps = jnp.pad(taps, ((0, 0), (0, m_pad - M), (0, 0)))
        att_rows = jnp.pad(att_rows, ((0, m_pad - M), (0, 0)))

    # Fold conv1(64->128) -> conv2(128->128) -> BatchNorm(eval) into one affine
    # (fold in f32, cast weight to bf16 for the MXU).
    w1 = params["w1"].reshape(c_out, C).T.astype(jnp.float32)       # [64, 128]
    w2 = params["w2"].reshape(c_out, c_out).T.astype(jnp.float32)   # [128, 128]
    bn_scale = params["bn_gamma"] / jnp.sqrt(params["bn_var"] + 1e-5)
    bn_shift = params["bn_beta"] - params["bn_mean"] * bn_scale
    w_fused = ((w1 @ w2) * bn_scale[None, :]).astype(jnp.bfloat16)  # [64, 128]
    b_fused = ((params["b1"] @ w2 + params["b2"]) * bn_scale
               + bn_shift).reshape(1, c_out).astype(jnp.float32)    # [1, 128]

    out = pl.pallas_call(
        attention_core_kernel,
        out_shape=jax.ShapeDtypeStruct((m_pad, c_out), jnp.float32),
        grid=(n_steps,),
        in_specs=[
            pl.BlockSpec((4, tm, C), lambda i: (0, i, 0)),   # pooling partials (bf16)
            pl.BlockSpec((tm, C), lambda i: (i, 0)),         # last_attention rows (bf16)
            pl.BlockSpec((C, c_out), lambda i: (0, 0)),      # fused weight (bf16)
            pl.BlockSpec((1, c_out), lambda i: (0, 0)),      # fused bias (f32)
        ],
        out_specs=pl.BlockSpec((tm, c_out), lambda i: (i, 0)),  # 128-lane dense
        compiler_params=pltpu.CompilerParams(
            dimension_semantics=("parallel",)),
    )(taps, att_rows, w_fused, b_fused)

    # Kept only to preserve the module's NCHW return layout (drop if the
    # consumer can take NHWC — it is an extra HBM read+write of the output).
    return out[:M].reshape(B, oh, ow, c_out).transpose(0, 3, 1, 2)


# ----------------------------------------------------------------------------
# Deterministic parameters for a freshly constructed AttentionCore
# ----------------------------------------------------------------------------
def init_params(key):
    keys = jax.random.split(key, 4)

    def norm(k, shape, scale=0.05):
        return (scale * jax.random.normal(k, shape)).astype(jnp.float32)

    return {
        # Conv2d(64, 128, kernel_size=1)
        "w1": norm(keys[0], (128, 64, 1, 1)),
        "b1": norm(keys[1], (128,)),
        # Conv2d(128, 128, kernel_size=1)
        "w2": norm(keys[2], (128, 128, 1, 1)),
        "b2": norm(keys[3], (128,)),
        # BatchNorm2d(128), freshly constructed: gamma=1, beta=0, stats 0/1
        "bn_gamma": jnp.ones((128,), jnp.float32),
        "bn_beta": jnp.zeros((128,), jnp.float32),
        "bn_mean": jnp.zeros((128,), jnp.float32),
        "bn_var": jnp.ones((128,), jnp.float32),
    }


if __name__ == "__main__":
    key = jax.random.PRNGKey(0)
    pkey, okey, akey = jax.random.split(key, 3)
    params = init_params(pkey)

    B, C, H, W = 2, 64, 16, 16
    OH = (H + 2 * 2 - 4) // 2 + 1   # 9
    OW = (W + 2 * 2 - 4) // 2 + 1   # 9
    observation = jax.random.normal(okey, (B, C, H, W), dtype=jnp.float32)
    last_attention = jax.random.normal(akey, (B, C, OH, OW), dtype=jnp.float32)

    fwd = jax.jit(functools.partial(attention_core_forward, params=params))
    out = fwd(observation, last_attention)
    jax.block_until_ready(out)
    assert out.shape == (B, 128, OH, OW), out.shape
    assert bool(jnp.all(jnp.isfinite(out)))
    print("KERNEL_OK")
</pallas_src>

<mosaic_0001>
module attributes {stable_mosaic.version = 11 : i64} {
  func.func @attention_core_kernel(%arg0: i32, %arg1: memref<4x128x64xbf16, #tpu.memory_space<vmem>>, %arg2: memref<128x64xbf16, #tpu.memory_space<vmem>>, %arg3: memref<64x128xbf16, #tpu.memory_space<vmem>>, %arg4: memref<1x128xf32, #tpu.memory_space<vmem>>, %arg5: memref<128x128xf32, #tpu.memory_space<vmem>>) attributes {dimension_semantics = [#tpu.dimension_semantics<parallel>], iteration_bounds = array<i64: 2>, scalar_prefetch = 0 : i64, scratch_operands = 0 : i64, tpu.core_type = #tpu.core_type<tc>, window_params = [{transform_indices = @transform_0, window_bounds = array<i64: 4, 128, 64>}, {transform_indices = @transform_1, window_bounds = array<i64: 128, 64>}, {pipeline_mode = #tpu.pipeline_mode<synchronous>, transform_indices = @transform_2, window_bounds = array<i64: 64, 128>}, {pipeline_mode = #tpu.pipeline_mode<synchronous>, transform_indices = @transform_3, window_bounds = array<i64: 1, 128>}, {transform_indices = @transform_4, window_bounds = array<i64: 128, 128>}]} {
    %c0 = arith.constant 0 : index
    %c0_0 = arith.constant 0 : index
    %c0_1 = arith.constant 0 : index
    %0 = vector.load %arg1[%c0, %c0_0, %c0_1] : memref<4x128x64xbf16, #tpu.memory_space<vmem>>, vector<1x128x64xbf16>
    %1 = vector.shape_cast %0 : vector<1x128x64xbf16> to vector<128x64xbf16>
    %2 = arith.extf %1 : vector<128x64xbf16> to vector<128x64xf32>
    %c1 = arith.constant 1 : index
    %c0_2 = arith.constant 0 : index
    %c0_3 = arith.constant 0 : index
    %3 = vector.load %arg1[%c1, %c0_2, %c0_3] : memref<4x128x64xbf16, #tpu.memory_space<vmem>>, vector<1x128x64xbf16>
    %4 = vector.shape_cast %3 : vector<1x128x64xbf16> to vector<128x64xbf16>
    %5 = arith.extf %4 : vector<128x64xbf16> to vector<128x64xf32>
    %6 = arith.maximumf %2, %5 : vector<128x64xf32>
    %c2 = arith.constant 2 : index
    %c0_4 = arith.constant 0 : index
    %c0_5 = arith.constant 0 : index
    %7 = vector.load %arg1[%c2, %c0_4, %c0_5] : memref<4x128x64xbf16, #tpu.memory_space<vmem>>, vector<1x128x64xbf16>
    %8 = vector.shape_cast %7 : vector<1x128x64xbf16> to vector<128x64xbf16>
    %9 = arith.extf %8 : vector<128x64xbf16> to vector<128x64xf32>
    %c3 = arith.constant 3 : index
    %c0_6 = arith.constant 0 : index
    %c0_7 = arith.constant 0 : index
    %10 = vector.load %arg1[%c3, %c0_6, %c0_7] : memref<4x128x64xbf16, #tpu.memory_space<vmem>>, vector<1x128x64xbf16>
    %11 = vector.shape_cast %10 : vector<1x128x64xbf16> to vector<128x64xbf16>
    %12 = arith.extf %11 : vector<128x64xbf16> to vector<128x64xf32>
    %13 = arith.addf %9, %12 : vector<128x64xf32>
    %cst = arith.constant 6.250000e-02 : f32
    %14 = vector.broadcast %cst : f32 to vector<128x64xf32>
    %15 = arith.mulf %13, %14 : vector<128x64xf32>
    %16 = arith.addf %6, %15 : vector<128x64xf32>
    %c0_8 = arith.constant 0 : index
    %c0_9 = arith.constant 0 : index
    %17 = vector.load %arg2[%c0_8, %c0_9] : memref<128x64xbf16, #tpu.memory_space<vmem>>, vector<128x64xbf16>
    %18 = arith.extf %17 : vector<128x64xbf16> to vector<128x64xf32>
    %19 = arith.mulf %16, %18 : vector<128x64xf32>
    %20 = arith.truncf %19 : vector<128x64xf32> to vector<128x64xbf16>
    %c0_10 = arith.constant 0 : index
    %c0_11 = arith.constant 0 : index
    %21 = vector.load %arg3[%c0_10, %c0_11] : memref<64x128xbf16, #tpu.memory_space<vmem>>, vector<64x128xbf16>
    %cst_12 = arith.constant dense<0.000000e+00> : vector<128x128xf32>
    %22 = tpu.matmul %20, %21, %cst_12 {dimension_numbers = #tpu.dot_dimension_numbers<[1], [0], [0], [1], [0, 0, 1, 1], [], []>} : vector<128x64xbf16>, vector<64x128xbf16>, vector<128x128xf32> -> vector<128x128xf32>
    %c0_13 = arith.constant 0 : index
    %c0_14 = arith.constant 0 : index
    %23 = vector.load %arg4[%c0_13, %c0_14] : memref<1x128xf32, #tpu.memory_space<vmem>>, vector<1x128xf32>
    %24 = vector.broadcast %23 : vector<1x128xf32> to vector<128x128xf32>
    %25 = arith.addf %22, %24 : vector<128x128xf32>
    %cst_15 = arith.constant 0.000000e+00 : f32
    %26 = vector.broadcast %cst_15 : f32 to vector<128x128xf32>
    %27 = arith.maximumf %25, %26 : vector<128x128xf32>
    %c0_16 = arith.constant 0 : index
    %c0_17 = arith.constant 0 : index
    %28 = vector.load %arg5[%c0_16, %c0_17] : memref<128x128xf32, #tpu.memory_space<vmem>>, vector<128x128xf32>
    tpu.vector_store %arg5[%c0_16, %c0_17], %27 {strides = array<i32>} : memref<128x128xf32, #tpu.memory_space<vmem>>, vector<128x128xf32>,
    return
  }
  func.func @transform_0(%arg0: i32) -> (i32, i32, i32) {
    %c0_i32 = arith.constant 0 : i32
    %c0_i32_0 = arith.constant 0 : i32
    %c0_i32_1 = arith.constant 0 : i32
    return %c0_i32, %arg0, %c0_i32_0 : i32, i32, i32
  }
  func.func @transform_1(%arg0: i32) -> (i32, i32) {
    %c0_i32 = arith.constant 0 : i32
    %c0_i32_0 = arith.constant 0 : i32
    return %arg0, %c0_i32 : i32, i32
  }
  func.func @transform_2(%arg0: i32) -> (i32, i32) {
    %c0_i32 = arith.constant 0 : i32
    %c0_i32_0 = arith.constant 0 : i32
    %c0_i32_1 = arith.constant 0 : i32
    return %c0_i32, %c0_i32_0 : i32, i32
  }
  func.func @transform_3(%arg0: i32) -> (i32, i32) {
    %c0_i32 = arith.constant 0 : i32
    %c0_i32_0 = arith.constant 0 : i32
    %c0_i32_1 = arith.constant 0 : i32
    return %c0_i32, %c0_i32_0 : i32, i32
  }
  func.func @transform_4(%arg0: i32) -> (i32, i32) {
    %c0_i32 = arith.constant 0 : i32
    %c0_i32_0 = arith.constant 0 : i32
    return %arg0, %c0_i32 : i32, i32
  }
}

</mosaic_0001>

<llo_original>
// kernel: attention_core_forward.1
$region0: #{attention_core_forward.1}
  #allocation0 [shape = 'u32[]', space=smem, size = 0x4, offset = 0x4, fixed_abs, tag = 'smem constant byte address 0x4 - core index']
  #allocation1 [shape = 'u32[72,128]{1,0:T(1,128)}', space=vmem, size = 0x9000, scoped, tag = 'internal scratch']
  %s0 = inlined_call_operand.vmem [shape: bf16[4,256,64], index: 0, kind: input, shape index: {}]
  %s1 = inlined_call_operand.vmem [shape: bf16[256,64], index: 1, kind: input, shape index: {}]
  %s2 = inlined_call_operand.vmem [shape: bf16[64,128], index: 2, kind: input, shape index: {}]
  %s3 = inlined_call_operand.vmem [shape: f32[1,128], index: 3, kind: input, shape index: {}]
  %s4 = inlined_call_operand.vmem [shape: f32[256,128], index: 4, kind: output, shape index: {}]
  %s5 = sld [smem:[#allocation0]]
  $region90: #{attention_core_forward.1} parent=0
    _
  %s7 = ssub.s32 1, %s5
  %s8 = scalar_select 0, %s7, %s5
  $region1: #{attention_core_forward.1} parent=0
    #allocation2 [shape = 'u8[262144]{0}', space=vmem, size = 0x40000, scoped, tag = 'input window, operand 0']
    loop: start=0, step=1, limit=4
    $region2: #{attention_core_forward.1} parent=1 // loop_pre_header
      _
    $region3: #{attention_core_forward.1} parent=1 // loop_header
      %s10 = sphi 0, %s14
      %p11 = scmp.ge.s32.totalorder %s10, 4
      %s20 = sphi 0, %s22
      %s23 = sphi 0, %s20
      %s24 = sphi 0, %s23
      %s40 = sphi 0, %s24
      %s46 = sphi 0, %s48
      %s49 = sphi 0, %s46
      %s50 = sphi 0, %s49
      %s66 = sphi 0, %s50
      %s70 = sphi 0, %s70
      %s72 = sphi 0, %s70
      %s73 = sphi 0, %s72
      %s87 = sphi 0, %s73
      %s91 = sphi 0, %s91
      %s93 = sphi 0, %s91
      %s94 = sphi 0, %s93
      %s108 = sphi 0, %s94
      %s114 = sphi 0, %s116
      %s117 = sphi 0, %s114
      %s118 = sphi 0, %s117
      %s134 = sphi 0, %s118
    $region4: #{attention_core_forward.1} parent=1 // loop_header_branch
      %13 = sbr.rel (%p11) target = $region8
    $region5: #{attention_core_forward.1} parent=1 // loop_body
      %s15 = ssub.s32 %s10, 1
      %s16 = ssub.s32 %s10, 2
      %s17 = sadd.s32 %s10, 1
      %s18 = ssub.s32 %s10, %s17
      %p19 = scmp.eq.s32.totalorder %s18, 0
      %s21 = sadd.s32 %s20, 1
      %s22 = scalar_select %p19, %s20, %s21
      %p25 = pneg %p19
      %p26 = scmp.eq.s32.totalorder %s10, 1
      %p27 = por %p25, %p26
      %p28 = scmp.ne.s32.totalorder %s20, %s23
      %p29 = scmp.eq.s32.totalorder %s10, 0
      %p30 = por %p28, %p29
      %p31 = scmp.ne.s32.totalorder %s20, %s23
      %p32 = scmp.eq.s32.totalorder %s15, 1
      %p33 = por %p31, %p32
      %p34 = scmp.ne.s32.totalorder %s23, %s24
      %p35 = scmp.eq.s32.totalorder %s15, 0
      %p36 = por %p34, %p35
      %p37 = scmp.ne.s32.totalorder %s23, %s24
      %p38 = scmp.eq.s32.totalorder %s16, 1
      %p39 = por %p37, %p38
      %p41 = scmp.ne.s32.totalorder %s24, %s40
      %p42 = scmp.eq.s32.totalorder %s16, 0
      %p43 = por %p41, %p42
      %s44 = ssub.s32 %s10, %s17
      %p45 = scmp.eq.s32.totalorder %s44, 0
      %s47 = sadd.s32 %s46, 1
      %s48 = scalar_select %p45, %s46, %s47
      %p51 = pneg %p45
      %p52 = scmp.eq.s32.totalorder %s10, 1
      %p53 = por %p51, %p52
      %p54 = scmp.ne.s32.totalorder %s46, %s49
      %p55 = scmp.eq.s32.totalorder %s10, 0
      %p56 = por %p54, %p55
      %p57 = scmp.ne.s32.totalorder %s46, %s49
      %p58 = scmp.eq.s32.totalorder %s15, 1
      %p59 = por %p57, %p58
      %p60 = scmp.ne.s32.totalorder %s49, %s50
      %p61 = scmp.eq.s32.totalorder %s15, 0
      %p62 = por %p60, %p61
      %p63 = scmp.ne.s32.totalorder %s49, %s50
      %p64 = scmp.eq.s32.totalorder %s16, 1
      %p65 = por %p63, %p64
      %p67 = scmp.ne.s32.totalorder %s50, %s66
      %p68 = scmp.eq.s32.totalorder %s16, 0
      %p69 = por %p67, %p68
      %s71 = sadd.s32 %s70, 1
      %p74 = scmp.eq.s32.totalorder %s10, 1
      %p75 = scmp.ne.s32.totalorder %s70, %s72
      %p76 = scmp.eq.s32.totalorder %s10, 0
      %p77 = por %p75, %p76
      %p78 = scmp.ne.s32.totalorder %s70, %s72
      %p79 = scmp.eq.s32.totalorder %s15, 1
      %p80 = por %p78, %p79
      %p81 = scmp.ne.s32.totalorder %s72, %s73
      %p82 = scmp.eq.s32.totalorder %s15, 0
      %p83 = por %p81, %p82
      %p84 = scmp.ne.s32.totalorder %s72, %s73
      %p85 = scmp.eq.s32.totalorder %s16, 1
      %p86 = por %p84, %p85
      %p88 = scmp.ne.s32.totalorder %s73, %s87
      %p89 = scmp.eq.s32.totalorder %s16, 0
      %p90 = por %p88, %p89
      %s92 = sadd.s32 %s91, 1
      %p95 = scmp.eq.s32.totalorder %s10, 1
      %p96 = scmp.ne.s32.totalorder %s91, %s93
      %p97 = scmp.eq.s32.totalorder %s10, 0
      %p98 = por %p96, %p97
      %p99 = scmp.ne.s32.totalorder %s91, %s93
      %p100 = scmp.eq.s32.totalorder %s15, 1
      %p101 = por %p99, %p100
      %p102 = scmp.ne.s32.totalorder %s93, %s94
      %p103 = scmp.eq.s32.totalorder %s15, 0
      %p104 = por %p102, %p103
      %p105 = scmp.ne.s32.totalorder %s93, %s94
      %p106 = scmp.eq.s32.totalorder %s16, 1
      %p107 = por %p105, %p106
      %p109 = scmp.ne.s32.totalorder %s94, %s108
      %p110 = scmp.eq.s32.totalorder %s16, 0
      %p111 = por %p109, %p110
      %s112 = ssub.s32 %s10, %s17
      %p113 = scmp.eq.s32.totalorder %s112, 0
      %s115 = sadd.s32 %s114, 1
      %s116 = scalar_select %p113, %s114, %s115
      %p119 = pneg %p113
      %p120 = scmp.eq.s32.totalorder %s10, 1
      %p121 = por %p119, %p120
      %p122 = scmp.ne.s32.totalorder %s114, %s117
      %p123 = scmp.eq.s32.totalorder %s10, 0
      %p124 = por %p122, %p123
      %p125 = scmp.ne.s32.totalorder %s114, %s117
      %p126 = scmp.eq.s32.totalorder %s15, 1
      %p127 = por %p125, %p126
      %p128 = scmp.ne.s32.totalorder %s117, %s118
      %p129 = scmp.eq.s32.totalorder %s15, 0
      %p130 = por %p128, %p129
      %p131 = scmp.ne.s32.totalorder %s117, %s118
      %p132 = scmp.eq.s32.totalorder %s16, 1
      %p133 = por %p131, %p132
      %p135 = scmp.ne.s32.totalorder %s118, %s134
      %p136 = scmp.eq.s32.totalorder %s16, 0
      %p137 = por %p135, %p136
      %p138 = scmp.le.s32.totalorder 1, %s10
      %p139 = scmp.lt.s32.totalorder %s10, 3
      %p140 = pnand %p138, %p139
      %p141 = pneg %p140
      // Predicated region
      $region9: #{attention_core_forward.1} parent=5 // pred_check
        _
      $region10: #{attention_core_forward.1} parent=5 // pred_check_branch
        %143 = sbr.rel (%p140) target = $region12
      $region11: #{attention_core_forward.1} parent=5 // pred_region
        %s144 = ssub.s32 %s10, 1
        // Predicated region
        $region13: #{attention_core_forward.1} parent=11 // pred_check
          %p145 = pneg %p83
        $region14: #{attention_core_forward.1} parent=11 // pred_check_branch
          %147 = sbr.rel (%p145) target = $region16
        $region15: #{attention_core_forward.1} parent=11 // pred_region
          _
        $region16: #{attention_core_forward.1} parent=11 // pred_fallthru
          _
        // Predicated region
        $region17: #{attention_core_forward.1} parent=11 // pred_check
          %p148 = pneg %p104
        $region18: #{attention_core_forward.1} parent=11 // pred_check_branch
          %150 = sbr.rel (%p148) target = $region20
        $region19: #{attention_core_forward.1} parent=11 // pred_region
          _
        $region20: #{attention_core_forward.1} parent=11 // pred_fallthru
          _
      $region12: #{attention_core_forward.1} parent=5 // pred_fallthru
        _
      %p151 = scmp.lt.s32.totalorder %s10, 2
      // Predicated region
      $region21: #{attention_core_forward.1} parent=5 // pred_check
        %p152 = pneg %p151
      $region22: #{attention_core_forward.1} parent=5 // pred_check_branch
        %154 = sbr.rel (%p152) target = $region24
      $region23: #{attention_core_forward.1} parent=5 // pred_region
        // Predicated region
        $region25: #{attention_core_forward.1} parent=23 // pred_check
          %p155 = pneg %p30
        $region26: #{attention_core_forward.1} parent=23 // pred_check_branch
          %157 = sbr.rel (%p155) target = $region28
        $region27: #{attention_core_forward.1} parent=23 // pred_region
          %s158 = sand.u32 %s20, 1
          %s159 = sand.u32 %s20, 1
          %s160 = smul.addr %s159, 256
          %s161 = scalar_lea.vmem [#allocation2], %s160
          %s162 = smul.u32 16, %s10
          %s163 = smul.addr %s162, 4
          %s164 = scalar_lea.vmem %s0, %s163
          // Predicated region
          $region29: #{attention_core_forward.1} parent=27 // pred_check
            _
          $region30: #{attention_core_forward.1} parent=27 // pred_check_branch
            %166 = sbr.rel (0) target = $region32
          $region31: #{attention_core_forward.1} parent=27 // pred_region
            // Predicated region
            $region33: #{attention_core_forward.1} parent=31 // pred_check
              _
            $region34: #{attention_core_forward.1} parent=31 // pred_check_branch
              %168 = sbr.rel target = $region36
            $region35: #{attention_core_forward.1} parent=31 // pred_region
              // Predicated region
              $region48: #{attention_core_forward.1} parent=35 // pred_check
                _
              $region49: #{attention_core_forward.1} parent=35 // pred_check_branch
                %310 = sbr.rel (0) target = $region51
              $region50: #{attention_core_forward.1} parent=35 // pred_region
                loop: start=0, step=1, limit=1
                $region52: #{attention_core_forward.1} parent=50 // loop_pre_header
                  _
                $region53: #{attention_core_forward.1} parent=50 // loop_header
                  %s312 = sphi 0, %s316
                  %p313 = scmp.ge.s32.totalorder %s312, 1
                  %s317 = sphi %s164, %s164
                  %s318 = sphi %s161, %s161
                $region54: #{attention_core_forward.1} parent=50 // loop_header_branch
                  %315 = sbr.rel (%p313) target = $region58
                $region55: #{attention_core_forward.1} parent=50 // loop_body
                  _
                $region56: #{attention_core_forward.1} parent=50 // loop_footer
                  %s316 = sadd.s32 1, %s312
                $region57: #{attention_core_forward.1} parent=50 // loop_footer_branch
                  %311 = sbr.rel target = $region53
                $region58: #{attention_core_forward.1} parent=50 // loop_exit
                  _
                %s320 = ssub.s32 16, 1
                loop: start=0, step=1, limit=1
                $region59: #{attention_core_forward.1} parent=50 // loop_pre_header
                  _
                $region60: #{attention_core_forward.1} parent=50 // loop_header
                  %s322 = sphi 0, %s326
                  %p323 = scmp.ge.s32.totalorder %s322, 1
                  %s327 = sphi %s164, %s164
                  %s328 = sphi %s161, %s161
                $region61: #{attention_core_forward.1} parent=50 // loop_header_branch
                  %325 = sbr.rel (%p323) target = $region65
                $region62: #{attention_core_forward.1} parent=50 // loop_body
                  %v329 = vld [vmem:[%s327] sm:%s320]
                  %330 = vst [vmem:[%s328] sm:%s320] %v329
                  %v331 = vld [vmem:[%s327 + $0x4] sm:%s320]
                  %332 = vst [vmem:[%s328 + $0x4] sm:%s320] %v331
                  %v333 = vld [vmem:[%s327 + $0x8] sm:%s320]
                  %334 = vst [vmem:[%s328 + $0x8] sm:%s320] %v333
                  %v335 = vld [vmem:[%s327 + $0xc] sm:%s320]
                  %336 = vst [vmem:[%s328 + $0xc] sm:%s320] %v335
                  %v337 = vld [vmem:[%s327 + $0x10] sm:%s320]
                  %338 = vst [vmem:[%s328 + $0x10] sm:%s320] %v337
                  %v339 = vld [vmem:[%s327 + $0x14] sm:%s320]
                  %340 = vst [vmem:[%s328 + $0x14] sm:%s320] %v339
                  %v341 = vld [vmem:[%s327 + $0x18] sm:%s320]
                  %342 = vst [vmem:[%s328 + $0x18] sm:%s320] %v341
                  %v343 = vld [vmem:[%s327 + $0x1c] sm:%s320]
                  %344 = vst [vmem:[%s328 + $0x1c] sm:%s320] %v343
                  %v345 = vld [vmem:[%s327 + $0x20] sm:%s320]
                  %346 = vst [vmem:[%s328 + $0x20] sm:%s320] %v345
                  %v347 = vld [vmem:[%s327 + $0x24] sm:%s320]
                  %348 = vst [vmem:[%s328 + $0x24] sm:%s320] %v347
                  %v349 = vld [vmem:[%s327 + $0x28] sm:%s320]
                  %350 = vst [vmem:[%s328 + $0x28] sm:%s320] %v349
                  %v351 = vld [vmem:[%s327 + $0x2c] sm:%s320]
                  %352 = vst [vmem:[%s328 + $0x2c] sm:%s320] %v351
                  %v353 = vld [vmem:[%s327 + $0x30] sm:%s320]
                  %354 = vst [vmem:[%s328 + $0x30] sm:%s320] %v353
                  %v355 = vld [vmem:[%s327 + $0x34] sm:%s320]
                  %356 = vst [vmem:[%s328 + $0x34] sm:%s320] %v355
                  %v357 = vld [vmem:[%s327 + $0x38] sm:%s320]
                  %358 = vst [vmem:[%s328 + $0x38] sm:%s320] %v357
                  %v359 = vld [vmem:[%s327 + $0x3c] sm:%s320]
                  %360 = vst [vmem:[%s328 + $0x3c] sm:%s320] %v359
                  %v361 = vld [vmem:[%s327 + $0x80] sm:%s320]
                  %362 = vst [vmem:[%s328 + $0x40] sm:%s320] %v361
                  %v363 = vld [vmem:[%s327 + $0x84] sm:%s320]
                  %364 = vst [vmem:[%s328 + $0x44] sm:%s320] %v363
                  %v365 = vld [vmem:[%s327 + $0x88] sm:%s320]
                  %366 = vst [vmem:[%s328 + $0x48] sm:%s320] %v365
                  %v367 = vld [vmem:[%s327 + $0x8c] sm:%s320]
                  %368 = vst [vmem:[%s328 + $0x4c] sm:%s320] %v367
                  %v369 = vld [vmem:[%s327 + $0x90] sm:%s320]
                  %370 = vst [vmem:[%s328 + $0x50] sm:%s320] %v369
                  %v371 = vld [vmem:[%s327 + $0x94] sm:%s320]
                  %372 = vst [vmem:[%s328 + $0x54] sm:%s320] %v371
                  %v373 = vld [vmem:[%s327 + $0x98] sm:%s320]
                  %374 = vst [vmem:[%s328 + $0x58] sm:%s320] %v373
                  %v375 = vld [vmem:[%s327 + $0x9c] sm:%s320]
                  %376 = vst [vmem:[%s328 + $0x5c] sm:%s320] %v375
                  %v377 = vld [vmem:[%s327 + $0xa0] sm:%s320]
                  %378 = vst [vmem:[%s328 + $0x60] sm:%s320] %v377
                  %v379 = vld [vmem:[%s327 + $0xa4] sm:%s320]
                  %380 = vst [vmem:[%s328 + $0x64] sm:%s320] %v379
                  %v381 = vld [vmem:[%s327 + $0xa8] sm:%s320]
                  %382 = vst [vmem:[%s328 + $0x68] sm:%s320] %v381
                  %v383 = vld [vmem:[%s327 + $0xac] sm:%s320]
                  %384 = vst [vmem:[%s328 + $0x6c] sm:%s320] %v383
                  %v385 = vld [vmem:[%s327 + $0xb0] sm:%s320]
                  %386 = vst [vmem:[%s328 + $0x70] sm:%s320] %v385
                  %v387 = vld [vmem:[%s327 + $0xb4] sm:%s320]
                  %388 = vst [vmem:[%s328 + $0x74] sm:%s320] %v387
                  %v389 = vld [vmem:[%s327 + $0xb8] sm:%s320]
                  %390 = vst [vmem:[%s328 + $0x78] sm:%s320] %v389
                  %v391 = vld [vmem:[%s327 + $0xbc] sm:%s320]
                  %392 = vst [vmem:[%s328 + $0x7c] sm:%s320] %v391
                  %v393 = vld [vmem:[%s327 + $0x100] sm:%s320]
                  %394 = vst [vmem:[%s328 + $0x80] sm:%s320] %v393
                  %v395 = vld [vmem:[%s327 + $0x104] sm:%s320]
                  %396 = vst [vmem:[%s328 + $0x84] sm:%s320] %v395
                  %v397 = vld [vmem:[%s327 + $0x108] sm:%s320]
                  %398 = vst [vmem:[%s328 + $0x88] sm:%s320] %v397
                  %v399 = vld [vmem:[%s327 + $0x10c] sm:%s320]
                  %400 = vst [vmem:[%s328 + $0x8c] sm:%s320] %v399
                  %v401 = vld [vmem:[%s327 + $0x110] sm:%s320]
                  %402 = vst [vmem:[%s328 + $0x90] sm:%s320] %v401
                  %v403 = vld [vmem:[%s327 + $0x114] sm:%s320]
                  %404 = vst [vmem:[%s328 + $0x94] sm:%s320] %v403
                  %v405 = vld [vmem:[%s327 + $0x118] sm:%s320]
                  %406 = vst [vmem:[%s328 + $0x98] sm:%s320] %v405
                  %v407 = vld [vmem:[%s327 + $0x11c] sm:%s320]
                  %408 = vst [vmem:[%s328 + $0x9c] sm:%s320] %v407
                  %v409 = vld [vmem:[%s327 + $0x120] sm:%s320]
                  %410 = vst [vmem:[%s328 + $0xa0] sm:%s320] %v409
                  %v411 = vld [vmem:[%s327 + $0x124] sm:%s320]
                  %412 = vst [vmem:[%s328 + $0xa4] sm:%s320] %v411
                  %v413 = vld [vmem:[%s327 + $0x128] sm:%s320]
                  %414 = vst [vmem:[%s328 + $0xa8] sm:%s320] %v413
                  %v415 = vld [vmem:[%s327 + $0x12c] sm:%s320]
                  %416 = vst [vmem:[%s328 + $0xac] sm:%s320] %v415
                  %v417 = vld [vmem:[%s327 + $0x130] sm:%s320]
                  %418 = vst [vmem:[%s328 + $0xb0] sm:%s320] %v417
                  %v419 = vld [vmem:[%s327 + $0x134] sm:%s320]
                  %420 = vst [vmem:[%s328 + $0xb4] sm:%s320] %v419
                  %v421 = vld [vmem:[%s327 + $0x138] sm:%s320]
                  %422 = vst [vmem:[%s328 + $0xb8] sm:%s320] %v421
                  %v423 = vld [vmem:[%s327 + $0x13c] sm:%s320]
                  %424 = vst [vmem:[%s328 + $0xbc] sm:%s320] %v423
                  %v425 = vld [vmem:[%s327 + $0x180] sm:%s320]
                  %426 = vst [vmem:[%s328 + $0xc0] sm:%s320] %v425
                  %v427 = vld [vmem:[%s327 + $0x184] sm:%s320]
                  %428 = vst [vmem:[%s328 + $0xc4] sm:%s320] %v427
                  %v429 = vld [vmem:[%s327 + $0x188] sm:%s320]
                  %430 = vst [vmem:[%s328 + $0xc8] sm:%s320] %v429
                  %v431 = vld [vmem:[%s327 + $0x18c] sm:%s320]
                  %432 = vst [vmem:[%s328 + $0xcc] sm:%s320] %v431
                  %v433 = vld [vmem:[%s327 + $0x190] sm:%s320]
                  %434 = vst [vmem:[%s328 + $0xd0] sm:%s320] %v433
                  %v435 = vld [vmem:[%s327 + $0x194] sm:%s320]
                  %436 = vst [vmem:[%s328 + $0xd4] sm:%s320] %v435
                  %v437 = vld [vmem:[%s327 + $0x198] sm:%s320]
                  %438 = vst [vmem:[%s328 + $0xd8] sm:%s320] %v437
                  %v439 = vld [vmem:[%s327 + $0x19c] sm:%s320]
                  %440 = vst [vmem:[%s328 + $0xdc] sm:%s320] %v439
                  %v441 = vld [vmem:[%s327 + $0x1a0] sm:%s320]
                  %442 = vst [vmem:[%s328 + $0xe0] sm:%s320] %v441
                  %v443 = vld [vmem:[%s327 + $0x1a4] sm:%s320]
                  %444 = vst [vmem:[%s328 + $0xe4] sm:%s320] %v443
                  %v445 = vld [vmem:[%s327 + $0x1a8] sm:%s320]
                  %446 = vst [vmem:[%s328 + $0xe8] sm:%s320] %v445
                  %v447 = vld [vmem:[%s327 + $0x1ac] sm:%s320]
                  %448 = vst [vmem:[%s328 + $0xec] sm:%s320] %v447
                  %v449 = vld [vmem:[%s327 + $0x1b0] sm:%s320]
                  %450 = vst [vmem:[%s328 + $0xf0] sm:%s320] %v449
                  %v451 = vld [vmem:[%s327 + $0x1b4] sm:%s320]
                  %452 = vst [vmem:[%s328 + $0xf4] sm:%s320] %v451
                  %v453 = vld [vmem:[%s327 + $0x1b8] sm:%s320]
                  %454 = vst [vmem:[%s328 + $0xf8] sm:%s320] %v453
                  %v455 = vld [vmem:[%s327 + $0x1bc] sm:%s320]
                  %456 = vst [vmem:[%s328 + $0xfc] sm:%s320] %v455
                $region63: #{attention_core_forward.1} parent=50 // loop_footer
                  %s326 = sadd.s32 1, %s322
                $region64: #{attention_core_forward.1} parent=50 // loop_footer_branch
                  %321 = sbr.rel target = $region60
                $region65: #{attention_core_forward.1} parent=50 // loop_exit
                  _
              $region51: #{attention_core_forward.1} parent=35 // pred_fallthru
                _
            $region36: #{attention_core_forward.1} parent=31 // pred_fallthru
              _
            // Predicated region
            $region37: #{attention_core_forward.1} parent=31 // pred_check
              _
            $region38: #{attention_core_forward.1} parent=31 // pred_check_branch
              %170 = sbr.rel (0) target = $region40
            $region39: #{attention_core_forward.1} parent=31 // pred_region
              %s172 = ssub.s32 16, 1
              loop: start=0, step=1, limit=1
              $region41: #{attention_core_forward.1} parent=39 // loop_pre_header
                _
              $region42: #{attention_core_forward.1} parent=39 // loop_header
                %s174 = sphi 0, %s178
                %p175 = scmp.ge.s32.totalorder %s174, 1
                %s179 = sphi %s164, %s164
                %s180 = sphi %s161, %s161
              $region43: #{attention_core_forward.1} parent=39 // loop_header_branch
                %177 = sbr.rel (%p175) target = $region47
              $region44: #{attention_core_forward.1} parent=39 // loop_body
                %v181 = vld [vmem:[%s179] sm:%s172]
                %182 = vst [vmem:[%s180] sm:%s172] %v181
                %v183 = vld [vmem:[%s179 + $0x4] sm:%s172]
                %184 = vst [vmem:[%s180 + $0x4] sm:%s172] %v183
                %v185 = vld [vmem:[%s179 + $0x8] sm:%s172]
                %186 = vst [vmem:[%s180 + $0x8] sm:%s172] %v185
                %v187 = vld [vmem:[%s179 + $0xc] sm:%s172]
                %188 = vst [vmem:[%s180 + $0xc] sm:%s172] %v187
                %v189 = vld [vmem:[%s179 + $0x10] sm:%s172]
                %190 = vst [vmem:[%s180 + $0x10] sm:%s172] %v189
                %v191 = vld [vmem:[%s179 + $0x14] sm:%s172]
                %192 = vst [vmem:[%s180 + $0x14] sm:%s172] %v191
                %v193 = vld [vmem:[%s179 + $0x18] sm:%s172]
                %194 = vst [vmem:[%s180 + $0x18] sm:%s172] %v193
                %v195 = vld [vmem:[%s179 + $0x1c] sm:%s172]
                %196 = vst [vmem:[%s180 + $0x1c] sm:%s172] %v195
                %v197 = vld [vmem:[%s179 + $0x20] sm:%s172]
                %198 = vst [vmem:[%s180 + $0x20] sm:%s172] %v197
                %v199 = vld [vmem:[%s179 + $0x24] sm:%s172]
                %200 = vst [vmem:[%s180 + $0x24] sm:%s172] %v199
                %v201 = vld [vmem:[%s179 + $0x28] sm:%s172]
                %202 = vst [vmem:[%s180 + $0x28] sm:%s172] %v201
                %v203 = vld [vmem:[%s179 + $0x2c] sm:%s172]
                %204 = vst [vmem:[%s180 + $0x2c] sm:%s172] %v203
                %v205 = vld [vmem:[%s179 + $0x30] sm:%s172]
                %206 = vst [vmem:[%s180 + $0x30] sm:%s172] %v205
                %v207 = vld [vmem:[%s179 + $0x34] sm:%s172]
                %208 = vst [vmem:[%s180 + $0x34] sm:%s172] %v207
                %v209 = vld [vmem:[%s179 + $0x38] sm:%s172]
                %210 = vst [vmem:[%s180 + $0x38] sm:%s172] %v209
                %v211 = vld [vmem:[%s179 + $0x3c] sm:%s172]
                %212 = vst [vmem:[%s180 + $0x3c] sm:%s172] %v211
                %v213 = vld [vmem:[%s179 + $0x80] sm:%s172]
                %214 = vst [vmem:[%s180 + $0x40] sm:%s172] %v213
                %v215 = vld [vmem:[%s179 + $0x84] sm:%s172]
                %216 = vst [vmem:[%s180 + $0x44] sm:%s172] %v215
                %v217 = vld [vmem:[%s179 + $0x88] sm:%s172]
                %218 = vst [vmem:[%s180 + $0x48] sm:%s172] %v217
                %v219 = vld [vmem:[%s179 + $0x8c] sm:%s172]
                %220 = vst [vmem:[%s180 + $0x4c] sm:%s172] %v219
                %v221 = vld [vmem:[%s179 + $0x90] sm:%s172]
                %222 = vst [vmem:[%s180 + $0x50] sm:%s172] %v221
                %v223 = vld [vmem:[%s179 + $0x94] sm:%s172]
                %224 = vst [vmem:[%s180 + $0x54] sm:%s172] %v223
                %v225 = vld [vmem:[%s179 + $0x98] sm:%s172]
                %226 = vst [vmem:[%s180 + $0x58] sm:%s172] %v225
                %v227 = vld [vmem:[%s179 + $0x9c] sm:%s172]
                %228 = vst [vmem:[%s180 + $0x5c] sm:%s172] %v227
                %v229 = vld [vmem:[%s179 + $0xa0] sm:%s172]
                %230 = vst [vmem:[%s180 + $0x60] sm:%s172] %v229
                %v231 = vld [vmem:[%s179 + $0xa4] sm:%s172]
                %232 = vst [vmem:[%s180 + $0x64] sm:%s172] %v231
                %v233 = vld [vmem:[%s179 + $0xa8] sm:%s172]
                %234 = vst [vmem:[%s180 + $0x68] sm:%s172] %v233
                %v235 = vld [vmem:[%s179 + $0xac] sm:%s172]
                %236 = vst [vmem:[%s180 + $0x6c] sm:%s172] %v235
                %v237 = vld [vmem:[%s179 + $0xb0] sm:%s172]
                %238 = vst [vmem:[%s180 + $0x70] sm:%s172] %v237
                %v239 = vld [vmem:[%s179 + $0xb4] sm:%s172]
                %240 = vst [vmem:[%s180 + $0x74] sm:%s172] %v239
                %v241 = vld [vmem:[%s179 + $0xb8] sm:%s172]
                %242 = vst [vmem:[%s180 + $0x78] sm:%s172] %v241
                %v243 = vld [vmem:[%s179 + $0xbc] sm:%s172]
                %244 = vst [vmem:[%s180 + $0x7c] sm:%s172] %v243
                %v245 = vld [vmem:[%s179 + $0x100] sm:%s172]
                %246 = vst [vmem:[%s180 + $0x80] sm:%s172] %v245
                %v247 = vld [vmem:[%s179 + $0x104] sm:%s172]
                %248 = vst [vmem:[%s180 + $0x84] sm:%s172] %v247
                %v249 = vld [vmem:[%s179 + $0x108] sm:%s172]
                %250 = vst [vmem:[%s180 + $0x88] sm:%s172] %v249
                %v251 = vld [vmem:[%s179 + $0x10c] sm:%s172]
                %252 = vst [vmem:[%s180 + $0x8c] sm:%s172] %v251
                %v253 = vld [vmem:[%s179 + $0x110] sm:%s172]
                %254 = vst [vmem:[%s180 + $0x90] sm:%s172] %v253
                %v255 = vld [vmem:[%s179 + $0x114] sm:%s172]
                %256 = vst [vmem:[%s180 + $0x94] sm:%s172] %v255
                %v257 = vld [vmem:[%s179 + $0x118] sm:%s172]
                %258 = vst [vmem:[%s180 + $0x98] sm:%s172] %v257
                %v259 = vld [vmem:[%s179 + $0x11c] sm:%s172]
                %260 = vst [vmem:[%s180 + $0x9c] sm:%s172] %v259
                %v261 = vld [vmem:[%s179 + $0x120] sm:%s172]
                %262 = vst [vmem:[%s180 + $0xa0] sm:%s172] %v261
                %v263 = vld [vmem:[%s179 + $0x124] sm:%s172]
                %264 = vst [vmem:[%s180 + $0xa4] sm:%s172] %v263
                %v265 = vld [vmem:[%s179 + $0x128] sm:%s172]
                %266 = vst [vmem:[%s180 + $0xa8] sm:%s172] %v265
                %v267 = vld [vmem:[%s179 + $0x12c] sm:%s172]
                %268 = vst [vmem:[%s180 + $0xac] sm:%s172] %v267
                %v269 = vld [vmem:[%s179 + $0x130] sm:%s172]
                %270 = vst [vmem:[%s180 + $0xb0] sm:%s172] %v269
                %v271 = vld [vmem:[%s179 + $0x134] sm:%s172]
                %272 = vst [vmem:[%s180 + $0xb4] sm:%s172] %v271
                %v273 = vld [vmem:[%s179 + $0x138] sm:%s172]
                %274 = vst [vmem:[%s180 + $0xb8] sm:%s172] %v273
                %v275 = vld [vmem:[%s179 + $0x13c] sm:%s172]
                %276 = vst [vmem:[%s180 + $0xbc] sm:%s172] %v275
                %v277 = vld [vmem:[%s179 + $0x180] sm:%s172]
                %278 = vst [vmem:[%s180 + $0xc0] sm:%s172] %v277
                %v279 = vld [vmem:[%s179 + $0x184] sm:%s172]
                %280 = vst [vmem:[%s180 + $0xc4] sm:%s172] %v279
                %v281 = vld [vmem:[%s179 + $0x188] sm:%s172]
                %282 = vst [vmem:[%s180 + $0xc8] sm:%s172] %v281
                %v283 = vld [vmem:[%s179 + $0x18c] sm:%s172]
                %284 = vst [vmem:[%s180 + $0xcc] sm:%s172] %v283
                %v285 = vld [vmem:[%s179 + $0x190] sm:%s172]
                %286 = vst [vmem:[%s180 + $0xd0] sm:%s172] %v285
                %v287 = vld [vmem:[%s179 + $0x194] sm:%s172]
                %288 = vst [vmem:[%s180 + $0xd4] sm:%s172] %v287
                %v289 = vld [vmem:[%s179 + $0x198] sm:%s172]
                %290 = vst [vmem:[%s180 + $0xd8] sm:%s172] %v289
                %v291 = vld [vmem:[%s179 + $0x19c] sm:%s172]
                %292 = vst [vmem:[%s180 + $0xdc] sm:%s172] %v291
                %v293 = vld [vmem:[%s179 + $0x1a0] sm:%s172]
                %294 = vst [vmem:[%s180 + $0xe0] sm:%s172] %v293
                %v295 = vld [vmem:[%s179 + $0x1a4] sm:%s172]
                %296 = vst [vmem:[%s180 + $0xe4] sm:%s172] %v295
                %v297 = vld [vmem:[%s179 + $0x1a8] sm:%s172]
                %298 = vst [vmem:[%s180 + $0xe8] sm:%s172] %v297
                %v299 = vld [vmem:[%s179 + $0x1ac] sm:%s172]
                %300 = vst [vmem:[%s180 + $0xec] sm:%s172] %v299
                %v301 = vld [vmem:[%s179 + $0x1b0] sm:%s172]
                %302 = vst [vmem:[%s180 + $0xf0] sm:%s172] %v301
                %v303 = vld [vmem:[%s179 + $0x1b4] sm:%s172]
                %304 = vst [vmem:[%s180 + $0xf4] sm:%s172] %v303
                %v305 = vld [vmem:[%s179 + $0x1b8] sm:%s172]
                %306 = vst [vmem:[%s180 + $0xf8] sm:%s172] %v305
                %v307 = vld [vmem:[%s179 + $0x1bc] sm:%s172]
                %308 = vst [vmem:[%s180 + $0xfc] sm:%s172] %v307
              $region45: #{attention_core_forward.1} parent=39 // loop_footer
                %s178 = sadd.s32 1, %s174
              $region46: #{attention_core_forward.1} parent=39 // loop_footer_branch
                %173 = sbr.rel target = $region42
              $region47: #{attention_core_forward.1} parent=39 // loop_exit
                _
            $region40: #{attention_core_forward.1} parent=31 // pred_fallthru
              _
          $region32: #{attention_core_forward.1} parent=27 // pred_fallthru
            _
          %457 = vnop
        $region28: #{attention_core_forward.1} parent=23 // pred_fallthru
          _
        // Predicated region
        $region66: #{attention_core_forward.1} parent=23 // pred_check
          %p458 = pneg %p56
        $region67: #{attention_core_forward.1} parent=23 // pred_check_branch
          %460 = sbr.rel (%p458) target = $region69
        $region68: #{attention_core_forward.1} parent=23 // pred_region
          %s461 = smul.u32 16, %s10
          %p462 = scmp.lt.s32.totalorder %s461, 31
          %s463 = scalar_select %p462, %s461, 31
          %s464 = smul.addr %s463, 4
          %s465 = scalar_lea.vmem %s1, %s464
          %s466 = smul.u32 16, %s10
        $region69: #{attention_core_forward.1} parent=23 // pred_fallthru
          _
      $region24: #{attention_core_forward.1} parent=5 // pred_fallthru
        _
      %p467 = scmp.le.s32.totalorder 1, %s10
      %p468 = scmp.lt.s32.totalorder %s10, 3
      %p469 = pnand %p467, %p468
      %p470 = pneg %p469
      // Predicated region
      $region70: #{attention_core_forward.1} parent=5 // pred_check
        _
      $region71: #{attention_core_forward.1} parent=5 // pred_check_branch
        %472 = sbr.rel (%p469) target = $region73
      $region72: #{attention_core_forward.1} parent=5 // pred_region
        %s473 = ssub.s32 %s10, 1
        %s474 = sand.u32 %s23, 1
        %s475 = sand.u32 %s23, 1
        %s476 = smul.addr %s475, 256
        %s477 = scalar_lea.vmem [#allocation2], %s476
        // Predicated region
        $region74: #{attention_core_forward.1} parent=72 // pred_check
          %p478 = pneg %p36
        $region75: #{attention_core_forward.1} parent=72 // pred_check_branch
          %480 = sbr.rel (%p478) target = $region77
        $region76: #{attention_core_forward.1} parent=72 // pred_region
          _
        $region77: #{attention_core_forward.1} parent=72 // pred_fallthru
          _
        %s481 = sand.u32 %s23, 1
        %s482 = sand.u32 %s23, 1
        %s483 = smul.addr %s482, 256
        %s484 = scalar_lea.vmem [#allocation2], %s483
        %p485 = pneg %p36
        %p486 = pneg %p33
        %s487 = smul.u32 16, %s15
        %p488 = scmp.lt.s32.totalorder %s487, 31
        %s489 = scalar_select %p488, %s487, 31
        %s490 = smul.addr %s489, 4
        %s491 = scalar_lea.vmem %s1, %s490
        %p492 = pneg %p62
        %p493 = pneg %p59
        %p494 = pneg %p83
        %p495 = pneg %p80
        %p496 = pneg %p104
        %p497 = pneg %p101
        %p498 = pneg %p130
        %p499 = pneg %p127
        %s500 = smul.u32 16, %s15
        %p501 = scmp.lt.s32.totalorder %s500, 31
        %s502 = scalar_select %p501, %s500, 31
        %s503 = smul.addr %s502, 8
        %s504 = scalar_lea.vmem %s4, %s503
        %s505 = smul.u32 16, %s15
        %s506 = smul.u32 16, %s15
        %p507 = scmp.lt.s32.totalorder %s506, 31
        %s508 = scalar_select %p507, %s506, 31
        %s509 = smul.addr %s508, 4
        %s510 = scalar_lea.vmem %s1, %s509
        %s511 = smul.u32 16, %s15
        %s512 = smul.u32 16, %s15
        %p513 = scmp.lt.s32.totalorder %s512, 31
        %s514 = scalar_select %p513, %s512, 31
        %s515 = smul.addr %s514, 8
        %s516 = scalar_lea.vmem %s4, %s515
        %s517 = smul.u32 16, %s15
        %v519 = vld [vmem:[%s477] sm:$0xf]
        %v520 = vld [vmem:[%s477 + $0x4] sm:$0xf]
        %v521 = vld [vmem:[%s477 + $0x8] sm:$0xf]
        %v522 = vld [vmem:[%s477 + $0xc] sm:$0xf]
        %v523 = vld [vmem:[%s477 + $0x10] sm:$0xf]
        %v524 = vld [vmem:[%s477 + $0x14] sm:$0xf]
        %v525 = vld [vmem:[%s477 + $0x18] sm:$0xf]
        %v526 = vld [vmem:[%s477 + $0x1c] sm:$0xf]
        %v527 = vld [vmem:[%s477 + $0x20] sm:$0xf]
        %v528 = vld [vmem:[%s477 + $0x24] sm:$0xf]
        %v529 = vld [vmem:[%s477 + $0x28] sm:$0xf]
        %v530 = vld [vmem:[%s477 + $0x2c] sm:$0xf]
        %v531 = vld [vmem:[%s477 + $0x30] sm:$0xf]
        %v532 = vld [vmem:[%s477 + $0x34] sm:$0xf]
        %v533 = vld [vmem:[%s477 + $0x38] sm:$0xf]
        %v534 = vld [vmem:[%s477 + $0x3c] sm:$0xf]
        %v535 = vunpack.c.l.bf16 %v519
        %v536 = vunpack.c.l.bf16 %v520
        %v537 = vunpack.c.l.bf16 %v521
        %v538 = vunpack.c.l.bf16 %v522
        %v539 = vunpack.c.l.bf16 %v523
        %v540 = vunpack.c.l.bf16 %v524
        %v541 = vunpack.c.l.bf16 %v525
        %v542 = vunpack.c.l.bf16 %v526
        %v543 = vunpack.c.l.bf16 %v527
        %v544 = vunpack.c.l.bf16 %v528
        %v545 = vunpack.c.l.bf16 %v529
        %v546 = vunpack.c.l.bf16 %v530
        %v547 = vunpack.c.l.bf16 %v531
        %v548 = vunpack.c.l.bf16 %v532
        %v549 = vunpack.c.l.bf16 %v533
        %v550 = vunpack.c.l.bf16 %v534
        %s551 = scalar_lea.vmem %s477, 64 [#allocation2]
        %v552 = vld [vmem:[%s551] sm:$0xf]
        %v553 = vld [vmem:[%s551 + $0x4] sm:$0xf]
        %v554 = vld [vmem:[%s551 + $0x8] sm:$0xf]
        %v555 = vld [vmem:[%s551 + $0xc] sm:$0xf]
        %v556 = vld [vmem:[%s551 + $0x10] sm:$0xf]
        %v557 = vld [vmem:[%s551 + $0x14] sm:$0xf]
        %v558 = vld [vmem:[%s551 + $0x18] sm:$0xf]
        %v559 = vld [vmem:[%s551 + $0x1c] sm:$0xf]
        %v560 = vld [vmem:[%s551 + $0x20] sm:$0xf]
        %v561 = vld [vmem:[%s551 + $0x24] sm:$0xf]
        %v562 = vld [vmem:[%s551 + $0x28] sm:$0xf]
        %v563 = vld [vmem:[%s551 + $0x2c] sm:$0xf]
        %v564 = vld [vmem:[%s551 + $0x30] sm:$0xf]
        %v565 = vld [vmem:[%s551 + $0x34] sm:$0xf]
        %v566 = vld [vmem:[%s551 + $0x38] sm:$0xf]
        %v567 = vld [vmem:[%s551 + $0x3c] sm:$0xf]
        %v568 = vunpack.c.l.bf16 %v552
        %v569 = vunpack.c.l.bf16 %v553
        %v570 = vunpack.c.l.bf16 %v554
        %v571 = vunpack.c.l.bf16 %v555
        %v572 = vunpack.c.l.bf16 %v556
        %v573 = vunpack.c.l.bf16 %v557
        %v574 = vunpack.c.l.bf16 %v558
        %v575 = vunpack.c.l.bf16 %v559
        %v576 = vunpack.c.l.bf16 %v560
        %v577 = vunpack.c.l.bf16 %v561
        %v578 = vunpack.c.l.bf16 %v562
        %v579 = vunpack.c.l.bf16 %v563
        %v580 = vunpack.c.l.bf16 %v564
        %v581 = vunpack.c.l.bf16 %v565
        %v582 = vunpack.c.l.bf16 %v566
        %v583 = vunpack.c.l.bf16 %v567
        %v584 = vmax.f32 %v535, %v568
        %v585 = vmax.f32 %v536, %v569
        %v586 = vmax.f32 %v537, %v570
        %v587 = vmax.f32 %v538, %v571
        %v588 = vmax.f32 %v539, %v572
        %v589 = vmax.f32 %v540, %v573
        %v590 = vmax.f32 %v541, %v574
        %v591 = vmax.f32 %v542, %v575
        %v592 = vmax.f32 %v543, %v576
        %v593 = vmax.f32 %v544, %v577
        %v594 = vmax.f32 %v545, %v578
        %v595 = vmax.f32 %v546, %v579
        %v596 = vmax.f32 %v547, %v580
        %v597 = vmax.f32 %v548, %v581
        %v598 = vmax.f32 %v549, %v582
        %v599 = vmax.f32 %v550, %v583
        %s600 = scalar_lea.vmem %s477, 128 [#allocation2]
        %v601 = vld [vmem:[%s600] sm:$0xf]
        %v602 = vld [vmem:[%s600 + $0x4] sm:$0xf]
        %v603 = vld [vmem:[%s600 + $0x8] sm:$0xf]
        %v604 = vld [vmem:[%s600 + $0xc] sm:$0xf]
        %v605 = vld [vmem:[%s600 + $0x10] sm:$0xf]
        %v606 = vld [vmem:[%s600 + $0x14] sm:$0xf]
        %v607 = vld [vmem:[%s600 + $0x18] sm:$0xf]
        %v608 = vld [vmem:[%s600 + $0x1c] sm:$0xf]
        %v609 = vld [vmem:[%s600 + $0x20] sm:$0xf]
        %v610 = vld [vmem:[%s600 + $0x24] sm:$0xf]
        %v611 = vld [vmem:[%s600 + $0x28] sm:$0xf]
        %v612 = vld [vmem:[%s600 + $0x2c] sm:$0xf]
        %v613 = vld [vmem:[%s600 + $0x30] sm:$0xf]
        %v614 = vld [vmem:[%s600 + $0x34] sm:$0xf]
        %v615 = vld [vmem:[%s600 + $0x38] sm:$0xf]
        %v616 = vld [vmem:[%s600 + $0x3c] sm:$0xf]
        %v617 = vunpack.c.l.bf16 %v601
        %v618 = vunpack.c.l.bf16 %v602
        %v619 = vunpack.c.l.bf16 %v603
        %v620 = vunpack.c.l.bf16 %v604
        %v621 = vunpack.c.l.bf16 %v605
        %v622 = vunpack.c.l.bf16 %v606
        %v623 = vunpack.c.l.bf16 %v607
        %v624 = vunpack.c.l.bf16 %v608
        %v625 = vunpack.c.l.bf16 %v609
        %v626 = vunpack.c.l.bf16 %v610
        %v627 = vunpack.c.l.bf16 %v611
        %v628 = vunpack.c.l.bf16 %v612
        %v629 = vunpack.c.l.bf16 %v613
        %v630 = vunpack.c.l.bf16 %v614
        %v631 = vunpack.c.l.bf16 %v615
        %v632 = vunpack.c.l.bf16 %v616
        %s633 = scalar_lea.vmem %s477, 192 [#allocation2]
        %v634 = vld [vmem:[%s633] sm:$0xf]
        %v635 = vld [vmem:[%s633 + $0x4] sm:$0xf]
        %v636 = vld [vmem:[%s633 + $0x8] sm:$0xf]
        %v637 = vld [vmem:[%s633 + $0xc] sm:$0xf]
        %v638 = vld [vmem:[%s633 + $0x10] sm:$0xf]
        %v639 = vld [vmem:[%s633 + $0x14] sm:$0xf]
        %v640 = vld [vmem:[%s633 + $0x18] sm:$0xf]
        %v641 = vld [vmem:[%s633 + $0x1c] sm:$0xf]
        %v642 = vld [vmem:[%s633 + $0x20] sm:$0xf]
        %v643 = vld [vmem:[%s633 + $0x24] sm:$0xf]
        %v644 = vld [vmem:[%s633 + $0x28] sm:$0xf]
        %v645 = vld [vmem:[%s633 + $0x2c] sm:$0xf]
        %v646 = vld [vmem:[%s633 + $0x30] sm:$0xf]
        %v647 = vld [vmem:[%s633 + $0x34] sm:$0xf]
        %v648 = vld [vmem:[%s633 + $0x38] sm:$0xf]
        %v649 = vld [vmem:[%s633 + $0x3c] sm:$0xf]
        %v650 = vunpack.c.l.bf16 %v634
        %v651 = vunpack.c.l.bf16 %v635
        %v652 = vunpack.c.l.bf16 %v636
        %v653 = vunpack.c.l.bf16 %v637
        %v654 = vunpack.c.l.bf16 %v638
        %v655 = vunpack.c.l.bf16 %v639
        %v656 = vunpack.c.l.bf16 %v640
        %v657 = vunpack.c.l.bf16 %v641
        %v658 = vunpack.c.l.bf16 %v642
        %v659 = vunpack.c.l.bf16 %v643
        %v660 = vunpack.c.l.bf16 %v644
        %v661 = vunpack.c.l.bf16 %v645
        %v662 = vunpack.c.l.bf16 %v646
        %v663 = vunpack.c.l.bf16 %v647
        %v664 = vunpack.c.l.bf16 %v648
        %v665 = vunpack.c.l.bf16 %v649
        %v666 = vadd.f32 %v617, %v650
        %v667 = vadd.f32 %v618, %v651
        %v668 = vadd.f32 %v619, %v652
        %v669 = vadd.f32 %v620, %v653
        %v670 = vadd.f32 %v621, %v654
        %v671 = vadd.f32 %v622, %v655
        %v672 = vadd.f32 %v623, %v656
        %v673 = vadd.f32 %v624, %v657
        %v674 = vadd.f32 %v625, %v658
        %v675 = vadd.f32 %v626, %v659
        %v676 = vadd.f32 %v627, %v660
        %v677 = vadd.f32 %v628, %v661
        %v678 = vadd.f32 %v629, %v662
        %v679 = vadd.f32 %v630, %v663
        %v680 = vadd.f32 %v631, %v664
        %v681 = vadd.f32 %v632, %v665
        %v682 = vmul.f32 %v666, 0.0625
        %v683 = vmul.f32 %v667, 0.0625
        %v684 = vmul.f32 %v668, 0.0625
        %v685 = vmul.f32 %v669, 0.0625
        %v686 = vmul.f32 %v670, 0.0625
        %v687 = vmul.f32 %v671, 0.0625
        %v688 = vmul.f32 %v672, 0.0625
        %v689 = vmul.f32 %v673, 0.0625
        %v690 = vmul.f32 %v674, 0.0625
        %v691 = vmul.f32 %v675, 0.0625
        %v692 = vmul.f32 %v676, 0.0625
        %v693 = vmul.f32 %v677, 0.0625
        %v694 = vmul.f32 %v678, 0.0625
        %v695 = vmul.f32 %v679, 0.0625
        %v696 = vmul.f32 %v680, 0.0625
        %v697 = vmul.f32 %v681, 0.0625
        %v698 = vadd.f32 %v584, %v682
        %v699 = vadd.f32 %v585, %v683
        %v700 = vadd.f32 %v586, %v684
        %v701 = vadd.f32 %v587, %v685
        %v702 = vadd.f32 %v588, %v686
        %v703 = vadd.f32 %v589, %v687
        %v704 = vadd.f32 %v590, %v688
        %v705 = vadd.f32 %v591, %v689
        %v706 = vadd.f32 %v592, %v690
        %v707 = vadd.f32 %v593, %v691
        %v708 = vadd.f32 %v594, %v692
        %v709 = vadd.f32 %v595, %v693
        %v710 = vadd.f32 %v596, %v694
        %v711 = vadd.f32 %v597, %v695
        %v712 = vadd.f32 %v598, %v696
        %v713 = vadd.f32 %v599, %v697
        %v714 = vld [vmem:[%s510] sm:$0xf]
        %v715 = vld [vmem:[%s510 + $0x4] sm:$0xf]
        %v716 = vld [vmem:[%s510 + $0x8] sm:$0xf]
        %v717 = vld [vmem:[%s510 + $0xc] sm:$0xf]
        %v718 = vld [vmem:[%s510 + $0x10] sm:$0xf]
        %v719 = vld [vmem:[%s510 + $0x14] sm:$0xf]
        %v720 = vld [vmem:[%s510 + $0x18] sm:$0xf]
        %v721 = vld [vmem:[%s510 + $0x1c] sm:$0xf]
        %v722 = vld [vmem:[%s510 + $0x20] sm:$0xf]
        %v723 = vld [vmem:[%s510 + $0x24] sm:$0xf]
        %v724 = vld [vmem:[%s510 + $0x28] sm:$0xf]
        %v725 = vld [vmem:[%s510 + $0x2c] sm:$0xf]
        %v726 = vld [vmem:[%s510 + $0x30] sm:$0xf]
        %v727 = vld [vmem:[%s510 + $0x34] sm:$0xf]
        %v728 = vld [vmem:[%s510 + $0x38] sm:$0xf]
        %v729 = vld [vmem:[%s510 + $0x3c] sm:$0xf]
        %v730 = vunpack.c.l.bf16 %v714
        %v731 = vunpack.c.l.bf16 %v715
        %v732 = vunpack.c.l.bf16 %v716
        %v733 = vunpack.c.l.bf16 %v717
        %v734 = vunpack.c.l.bf16 %v718
        %v735 = vunpack.c.l.bf16 %v719
        %v736 = vunpack.c.l.bf16 %v720
        %v737 = vunpack.c.l.bf16 %v721
        %v738 = vunpack.c.l.bf16 %v722
        %v739 = vunpack.c.l.bf16 %v723
        %v740 = vunpack.c.l.bf16 %v724
        %v741 = vunpack.c.l.bf16 %v725
        %v742 = vunpack.c.l.bf16 %v726
        %v743 = vunpack.c.l.bf16 %v727
        %v744 = vunpack.c.l.bf16 %v728
        %v745 = vunpack.c.l.bf16 %v729
        %v746 = vmul.f32 %v698, %v730
        %v747 = vmul.f32 %v699, %v731
        %v748 = vmul.f32 %v700, %v732
        %v749 = vmul.f32 %v701, %v733
        %v750 = vmul.f32 %v702, %v734
        %v751 = vmul.f32 %v703, %v735
        %v752 = vmul.f32 %v704, %v736
        %v753 = vmul.f32 %v705, %v737
        %v754 = vmul.f32 %v706, %v738
        %v755 = vmul.f32 %v707, %v739
        %v756 = vmul.f32 %v708, %v740
        %v757 = vmul.f32 %v709, %v741
        %v758 = vmul.f32 %v710, %v742
        %v759 = vmul.f32 %v711, %v743
        %v760 = vmul.f32 %v712, %v744
        %v761 = vmul.f32 %v713, %v745
        %v762 = vpack.c.bf16 %v747, %v746
        %v763 = vpack.c.bf16 %v749, %v748
        %v764 = vpack.c.bf16 %v751, %v750
        %v765 = vpack.c.bf16 %v753, %v752
        %v766 = vpack.c.bf16 %v755, %v754
        %v767 = vpack.c.bf16 %v757, %v756
        %v768 = vpack.c.bf16 %v759, %v758
        %v769 = vpack.c.bf16 %v761, %v760
        %v770 = vld [vmem:[%s2] sm:$0xf]
        %v771 = vld [vmem:[%s2 + $0x4] sm:$0xf]
        %v772 = vld [vmem:[%s2 + $0x8] sm:$0xf]
        %v773 = vld [vmem:[%s2 + $0xc] sm:$0xf]
        %v774 = vld [vmem:[%s2 + $0x10] sm:$0xf]
        %v775 = vld [vmem:[%s2 + $0x14] sm:$0xf]
        %v776 = vld [vmem:[%s2 + $0x18] sm:$0xf]
        %v777 = vld [vmem:[%s2 + $0x1c] sm:$0xf]
        %v778 = vld [vmem:[%s3] sm:$0x1]
        %v780 = vperm.slane %v778, 0
        %v790 = vunpack.c.l.b16 %v770
        %v791 = vunpack.c.l.b16 %v771
        %v792 = vunpack.c.l.b16 %v772
        %v793 = vunpack.c.l.b16 %v773
        %v794 = vunpack.c.l.b16 %v774
        %v795 = vunpack.c.l.b16 %v775
        %v796 = vunpack.c.l.b16 %v776
        %v797 = vunpack.c.l.b16 %v777
        %v798 = vpack.c.b16 %v791, %v790
        %v799 = vpack.c.b16 %v793, %v792
        %v800 = vpack.c.b16 %v795, %v794
        %v801 = vpack.c.b16 %v797, %v796
        %vm806 = vcmask 523264
        %v808 = vsel %vm806, %v762, 0
        %v811 = vsel %vm806, %v763, 0
        %v814 = vsel %vm806, %v764, 0
        %v817 = vsel %vm806, %v765, 0
        %v820 = vsel %vm806, %v766, 0
        %v823 = vsel %vm806, %v767, 0
        %v826 = vsel %vm806, %v768, 0
        %v829 = vsel %vm806, %v769, 0
        %831 = vmatpush.bf16.msra.mxu0 0
        %832 = vmatpush.bf16.msra.mxu0 0
        %833 = vmatpush.bf16.msra.mxu0 0
        %834 = vmatpush.bf16.msra.mxu0 0
        %835 = vmatpush.bf16.msra.mxu0 %v801
        %836 = vmatpush.bf16.msra.mxu0 %v800
        %837 = vmatpush.bf16.msra.mxu0 %v799
        %838 = vmatpush.bf16.msra.mxu0 %v798
        %839 = vmatmul.bf16.gmra.mxu0 %v808
        %v840 = vpop.f32.mrf.mxu0
        %v841 = vadd.f32 %v780, %v840
        %v842 = vpop.f32.mrf.mxu0
        %v843 = vadd.f32 %v780, %v842
        %844 = vmatmul.bf16.gmra.mxu0 %v811
        %v845 = vpop.f32.mrf.mxu0
        %v846 = vadd.f32 %v780, %v845
        %v847 = vpop.f32.mrf.mxu0
        %v848 = vadd.f32 %v780, %v847
        %849 = vmatmul.bf16.gmra.mxu0 %v814
        %v850 = vpop.f32.mrf.mxu0
        %v851 = vadd.f32 %v780, %v850
        %v852 = vpop.f32.mrf.mxu0
        %v853 = vadd.f32 %v780, %v852
        %854 = vmatmul.bf16.gmra.mxu0 %v817
        %v855 = vpop.f32.mrf.mxu0
        %v856 = vadd.f32 %v780, %v855
        %v857 = vpop.f32.mrf.mxu0
        %v858 = vadd.f32 %v780, %v857
        %859 = vmatmul.bf16.gmra.mxu0 %v820
        %v860 = vpop.f32.mrf.mxu0
        %v861 = vadd.f32 %v780, %v860
        %v862 = vpop.f32.mrf.mxu0
        %v863 = vadd.f32 %v780, %v862
        %864 = vmatmul.bf16.gmra.mxu0 %v823
        %v865 = vpop.f32.mrf.mxu0
        %v866 = vadd.f32 %v780, %v865
        %v867 = vpop.f32.mrf.mxu0
        %v868 = vadd.f32 %v780, %v867
        %869 = vmatmul.bf16.gmra.mxu0 %v826
        %v870 = vpop.f32.mrf.mxu0
        %v871 = vadd.f32 %v780, %v870
        %v872 = vpop.f32.mrf.mxu0
        %v873 = vadd.f32 %v780, %v872
        %874 = vmatmul.bf16.gmra.mxu0 %v829
        %v875 = vpop.f32.mrf.mxu0
        %v876 = vadd.f32 %v780, %v875
        %v877 = vpop.f32.mrf.mxu0
        %v878 = vadd.f32 %v780, %v877
        %879 = vdwg.mxu0
        %v880 = vmax.f32 %v841, 0.0
        %v881 = vmax.f32 %v843, 0.0
        %v882 = vmax.f32 %v846, 0.0
        %v883 = vmax.f32 %v848, 0.0
        %v884 = vmax.f32 %v851, 0.0
        %v885 = vmax.f32 %v853, 0.0
        %v886 = vmax.f32 %v856, 0.0
        %v887 = vmax.f32 %v858, 0.0
        %v888 = vmax.f32 %v861, 0.0
        %v889 = vmax.f32 %v863, 0.0
        %v890 = vmax.f32 %v866, 0.0
        %v891 = vmax.f32 %v868, 0.0
        %v892 = vmax.f32 %v871, 0.0
        %v893 = vmax.f32 %v873, 0.0
        %v894 = vmax.f32 %v876, 0.0
        %v895 = vmax.f32 %v878, 0.0
        %896 = vst [vmem:[%s516] sm:$0xff] %v880
        %897 = vst [vmem:[%s516 + $0x8] sm:$0xff] %v881
        %898 = vst [vmem:[%s516 + $0x10] sm:$0xff] %v882
        %899 = vst [vmem:[%s516 + $0x18] sm:$0xff] %v883
        %900 = vst [vmem:[%s516 + $0x20] sm:$0xff] %v884
        %901 = vst [vmem:[%s516 + $0x28] sm:$0xff] %v885
        %902 = vst [vmem:[%s516 + $0x30] sm:$0xff] %v886
        %903 = vst [vmem:[%s516 + $0x38] sm:$0xff] %v887
        %904 = vst [vmem:[%s516 + $0x40] sm:$0xff] %v888
        %905 = vst [vmem:[%s516 + $0x48] sm:$0xff] %v889
        %906 = vst [vmem:[%s516 + $0x50] sm:$0xff] %v890
        %907 = vst [vmem:[%s516 + $0x58] sm:$0xff] %v891
        %908 = vst [vmem:[%s516 + $0x60] sm:$0xff] %v892
        %909 = vst [vmem:[%s516 + $0x68] sm:$0xff] %v893
        %910 = vst [vmem:[%s516 + $0x70] sm:$0xff] %v894
        %911 = vst [vmem:[%s516 + $0x78] sm:$0xff] %v895
        %s912 = smul.u32 16, %s15
        %p913 = scmp.lt.s32.totalorder %s912, 31
        %s914 = scalar_select %p913, %s912, 31
        %s915 = smul.addr %s914, 8
        %s916 = scalar_lea.vmem %s4, %s915
        // Predicated region
        $region78: #{attention_core_forward.1} parent=72 // pred_check
          %p917 = pneg %p127
        $region79: #{attention_core_forward.1} parent=72 // pred_check_branch
          %919 = sbr.rel (%p917) target = $region81
        $region80: #{attention_core_forward.1} parent=72 // pred_region
          %s920 = smul.u32 16, %s15
        $region81: #{attention_core_forward.1} parent=72 // pred_fallthru
          _
      $region73: #{attention_core_forward.1} parent=5 // pred_fallthru
        _
      %p921 = scmp.le.s32.totalorder 2, %s10
      // Predicated region
      $region82: #{attention_core_forward.1} parent=5 // pred_check
        %p922 = pneg %p921
      $region83: #{attention_core_forward.1} parent=5 // pred_check_branch
        %924 = sbr.rel (%p922) target = $region85
      $region84: #{attention_core_forward.1} parent=5 // pred_region
        %s925 = ssub.s32 %s10, 2
        // Predicated region
        $region86: #{attention_core_forward.1} parent=84 // pred_check
          %p926 = pneg %p133
        $region87: #{attention_core_forward.1} parent=84 // pred_check_branch
          %928 = sbr.rel (%p926) target = $region89
        $region88: #{attention_core_forward.1} parent=84 // pred_region
          %s929 = smul.u32 16, %s16
          %p930 = scmp.lt.s32.totalorder %s929, 31
          %s931 = scalar_select %p930, %s929, 31
          %s932 = smul.addr %s931, 8
          %s933 = scalar_lea.vmem %s4, %s932
        $region89: #{attention_core_forward.1} parent=84 // pred_fallthru
          _
      $region85: #{attention_core_forward.1} parent=5 // pred_fallthru
        _
    $region6: #{attention_core_forward.1} parent=1 // loop_footer
      %s14 = sadd.s32 1, %s10
    $region7: #{attention_core_forward.1} parent=1 // loop_footer_branch
      %9 = sbr.rel target = $region3
    $region8: #{attention_core_forward.1} parent=1 // loop_exit
      _

</llo_original>
